<compile_context>
chip_gen: v7x
topology: tpu7x:2x2x1
jax: 0.10.0
libtpu: 0.0.40
codegen_flags: <defaults>
</compile_context>

<pallas_src>
import math
from functools import partial

import jax
import jax.numpy as jnp
from jax.experimental import pallas as pl
from jax.experimental.pallas import tpu as pltpu


# ----------------------------- Kernel A: fused QKV + RoPE --------------------
def _qkv_rope_kernel(x_ref, cos_ref, sin_ref, w_ref, qkv_ref, *,
                     n_heads, head_dim, heads_per_block, n_rope_blocks,
                     full_block):
    x = x_ref[0]                                              # [TS, H] (compute dtype)
    # One MXU matmul per (seq-tile, head-group): [TS, H] @ [H, block_n].
    proj = jnp.dot(x, w_ref[...],
                   preferred_element_type=jnp.float32)        # [TS, block_n] f32
    ts = proj.shape[0]
    proj = proj.reshape(ts, heads_per_block, head_dim)        # [TS, hpb, hd]

    cos = cos_ref[0][:, None, :]                              # [TS, 1, hd] f32
    sin_signed = sin_ref[0][:, None, :]                       # sign-folded sin, f32
    half = head_dim // 2

    def rope(t):
        # rotate_half(t)*sin == roll(t, hd/2)*sin_signed (sign folded in glue).
        if head_dim % 128 == 0:
            rot = pltpu.roll(t, shift=half, axis=t.ndim - 1)  # XLU slot
        else:
            rot = jnp.concatenate([t[..., half:], t[..., :half]], axis=-1)
        return t * cos + rot * sin_signed

    if full_block:
        # Single weight block covering q|k|v (small-H fallback): rope q,k only.
        q = rope(proj[:, :n_heads])
        k = rope(proj[:, n_heads:2 * n_heads])
        v = proj[:, 2 * n_heads:]
        out = jnp.concatenate([q, k, v], axis=1)
    else:
        # Streamed path: this block is entirely q/k (rope) or entirely v (no rope).
        gate = (pl.program_id(2) < n_rope_blocks).astype(jnp.float32)
        out = gate * rope(proj) + (1.0 - gate) * proj

    # Head-major [hpb, TS, hd] layout (what the attention kernel consumes).
    qkv_ref[0] = jnp.transpose(out, (1, 0, 2)).astype(qkv_ref.dtype)


# ------------------------ Kernel B: flash attention ---------------------------
def _flash_attn_kernel(q_ref, k_ref, v_ref, ctx_ref, m_sc, l_sc, acc_sc, *,
                       exp_dtype, approx_recip):
    kv = pl.program_id(2)

    @pl.when(kv == 0)
    def _init():
        m_sc[...] = jnp.full(m_sc.shape, -jnp.inf, dtype=m_sc.dtype)
        l_sc[...] = jnp.zeros(l_sc.shape, dtype=l_sc.dtype)
        acc_sc[...] = jnp.zeros(acc_sc.shape, dtype=acc_sc.dtype)

    q = q_ref[0]                                              # [nh, TQ, hd]
    k = k_ref[0]                                              # [nh, TK, hd]
    v = v_ref[0]                                              # [nh, TK, hd]

    # q already carries 1/sqrt(head_dim) (folded into Wq columns in glue).
    s = jnp.einsum('hqd,hkd->hqk', q, k,
                   preferred_element_type=jnp.float32)        # [nh, TQ, TK] f32

    m_prev = m_sc[...]                                        # [nh, TQ]
    m_new = jnp.maximum(m_prev, jnp.max(s, axis=-1))
    alpha = jnp.exp(m_prev - m_new)                           # f32, tiny
    # exp in bf16 on the bf16 path (EUP relief); m/l/acc stay f32.
    p = jnp.exp((s - m_new[..., None]).astype(exp_dtype))
    l_sc[...] = alpha * l_sc[...] + jnp.sum(p.astype(jnp.float32), axis=-1)
    acc_sc[...] = alpha[..., None] * acc_sc[...] + jnp.einsum(
        'hqk,hkd->hqd', p.astype(v.dtype), v,
        preferred_element_type=jnp.float32)
    m_sc[...] = m_new

    @pl.when(kv == pl.num_programs(2) - 1)
    def _finalize():
        inv_l = pl.reciprocal(l_sc[...], approx=approx_recip)[..., None]
        ctx = acc_sc[...] * inv_l                             # [nh, TQ, hd] f32
        nh, tq, hd = ctx.shape
        # lane-dense [TQ, H] slab for the o_proj kernel.
        ctx = jnp.transpose(ctx, (1, 0, 2)).reshape(tq, nh * hd)
        ctx_ref[0] = ctx.astype(ctx_ref.dtype)


# -------------------- Kernel C: output projection (Wo streamed) --------------
def _o_proj_kernel(ctx_ref, w_ref, o_ref):
    o_ref[0] = jnp.dot(ctx_ref[0], w_ref[...],
                       preferred_element_type=jnp.float32).astype(o_ref.dtype)


# --------------------------------- helpers ------------------------------------
def _row_block(S, target):
    b = min(target, S)
    if S % b == 0:
        return b
    b -= b % 8
    while b >= 8:
        if S % b == 0:
            return b
        b -= 8
    return S


def _choose_qkv_col_heads(n_heads, head_dim, target_cols):
    """Largest head-group whose column block is lane-aligned and <= target."""
    best = None
    for hpb in range(1, n_heads + 1):
        if n_heads % hpb:
            continue
        bn = hpb * head_dim
        if bn <= target_cols and bn % 128 == 0:
            best = hpb
    return best


def _choose_out_cols(H, target):
    best = H
    for bn in range(128, min(H, target) + 1, 128):
        if H % bn == 0:
            best = bn
    return best


# --------------------------------- Wrapper -----------------------------------
def llama_attention_pallas(x, position_ids, wq, wk, wv, wo, *,
                           n_heads, head_dim, rope_base=10000.0,
                           compute_dtype=jnp.bfloat16,
                           block_s=512, block_q=256, block_kv=512,
                           block_out_rows=512,
                           qkv_col_target=512, out_col_target=512):
    B, S, H = x.shape
    assert n_heads * head_dim == H

    block_s = _row_block(S, block_s)
    block_q = _row_block(S, block_q)
    block_kv = _row_block(S, block_kv)
    block_r = _row_block(S, block_out_rows)

    # --- glue: RoPE cos/sin tables (HF convention), f32.  The +/-1 sign of
    # rotate_half is folded into sin so the kernel only needs a roll + mul. ---
    inv_freq = 1.0 / (rope_base ** (jnp.arange(0, head_dim, 2,
                                               dtype=jnp.float32) / head_dim))
    freqs = position_ids.astype(jnp.float32)[:, :, None] * inv_freq[None, None, :]
    emb = jnp.concatenate([freqs, freqs], axis=-1)            # [B, S, hd]
    cos = jnp.cos(emb)
    half = head_dim // 2
    sign = jnp.concatenate([-jnp.ones((half,), jnp.float32),
                            jnp.ones((half,), jnp.float32)])
    sin_signed = jnp.sin(emb) * sign

    # --- glue: fused QKV weight [H, 3H]; softmax scale folded into Wq ---
    scale = 1.0 / math.sqrt(head_dim)
    wqkv = jnp.concatenate([wq * scale, wk, wv], axis=1).astype(compute_dtype)
    wo_c = wo.astype(compute_dtype)
    x_c = x.astype(compute_dtype)   # pre-cast: halves Kernel A's x DMA on bf16 path

    approx_recip = (compute_dtype != jnp.float32)
    exp_dtype = jnp.bfloat16 if compute_dtype == jnp.bfloat16 else jnp.float32
    vmem_limit = 64 * 1024 * 1024   # fits every generation (v7x = 64 MiB)

    # ---- Kernel A: fused QKV projection + RoPE, Wqkv streamed by head group ----
    hpb = _choose_qkv_col_heads(n_heads, head_dim, qkv_col_target)
    if hpb is None:
        # Small-H fallback: one block covering all of q|k|v (lane-alignment rule).
        hpb, full_block, n_wblocks, n_rope_blocks = 3 * n_heads, True, 1, 0
    else:
        full_block = False
        n_wblocks = (3 * n_heads) // hpb
        n_rope_blocks = (2 * n_heads) // hpb
    block_n = hpb * head_dim

    # TODO(synk): on v7x, pick B and S//block_s so B * S//block_s is even — an
    # odd/size-1 parallel extent idles one of the two TensorCores.
    qkv = pl.pallas_call(
        partial(_qkv_rope_kernel, n_heads=n_heads, head_dim=head_dim,
                heads_per_block=hpb, n_rope_blocks=n_rope_blocks,
                full_block=full_block),
        out_shape=jax.ShapeDtypeStruct((B, 3 * n_heads, S, head_dim),
                                       compute_dtype),
        grid_spec=pltpu.PrefetchScalarGridSpec(
            num_scalar_prefetch=0,
            grid=(B, S // block_s, n_wblocks),
            in_specs=[
                pl.BlockSpec((1, block_s, H), lambda b, s, n: (b, s, 0)),          # x
                pl.BlockSpec((1, block_s, head_dim), lambda b, s, n: (b, s, 0)),   # cos
                pl.BlockSpec((1, block_s, head_dim), lambda b, s, n: (b, s, 0)),   # sin
                pl.BlockSpec((H, block_n), lambda b, s, n: (0, n)),                # Wqkv cols
            ],
            out_specs=pl.BlockSpec((1, hpb, block_s, head_dim),
                                   lambda b, s, n: (b, n, s, 0)),
        ),
        compiler_params=pltpu.CompilerParams(
            dimension_semantics=("parallel", "parallel", "arbitrary"),
            vmem_limit_bytes=vmem_limit),
    )(x_c, cos, sin_signed, wqkv)

    # ---- Kernel B: flash attention (online softmax); o_proj hoisted out ----
    # q/k/v are head-blocks 0/1/2 of the fused qkv array.
    ctx = pl.pallas_call(
        partial(_flash_attn_kernel, exp_dtype=exp_dtype,
                approx_recip=approx_recip),
        out_shape=jax.ShapeDtypeStruct((B, S, H), compute_dtype),
        grid_spec=pltpu.PrefetchScalarGridSpec(
            num_scalar_prefetch=0,
            grid=(B, S // block_q, S // block_kv),
            in_specs=[
                pl.BlockSpec((1, n_heads, block_q, head_dim),
                             lambda b, qi, ki: (b, 0, qi, 0)),                     # q heads
                pl.BlockSpec((1, n_heads, block_kv, head_dim),
                             lambda b, qi, ki: (b, 1, ki, 0)),                     # k heads
                pl.BlockSpec((1, n_heads, block_kv, head_dim),
                             lambda b, qi, ki: (b, 2, ki, 0)),                     # v heads
            ],
            out_specs=pl.BlockSpec((1, block_q, H),
                                   lambda b, qi, ki: (b, qi, 0)),
            scratch_shapes=[
                pltpu.VMEM((n_heads, block_q), jnp.float32),            # m (no padded dim)
                pltpu.VMEM((n_heads, block_q), jnp.float32),            # l
                pltpu.VMEM((n_heads, block_q, head_dim), jnp.float32),  # acc
            ],
        ),
        compiler_params=pltpu.CompilerParams(
            dimension_semantics=("parallel", "parallel", "arbitrary"),
            vmem_limit_bytes=vmem_limit),
    )(qkv, qkv, qkv)

    # ---- Kernel C: output projection with Wo streamed in column blocks ----
    block_no = _choose_out_cols(H, out_col_target)
    out = pl.pallas_call(
        _o_proj_kernel,
        out_shape=jax.ShapeDtypeStruct((B, S, H), x.dtype),
        grid_spec=pltpu.PrefetchScalarGridSpec(
            num_scalar_prefetch=0,
            grid=(B, S // block_r, H // block_no),
            in_specs=[
                pl.BlockSpec((1, block_r, H), lambda b, r, n: (b, r, 0)),          # ctx
                pl.BlockSpec((H, block_no), lambda b, r, n: (0, n)),               # Wo cols
            ],
            out_specs=pl.BlockSpec((1, block_r, block_no),
                                   lambda b, r, n: (b, r, n)),
        ),
        compiler_params=pltpu.CompilerParams(
            dimension_semantics=("parallel", "parallel", "arbitrary"),
            vmem_limit_bytes=vmem_limit),
    )(ctx, wo_c)

    return out


# --------------------------- Pure-JAX reference -------------------------------
def llama_attention_ref(x, position_ids, wq, wk, wv, wo, *,
                        n_heads, head_dim, rope_base=10000.0):
    """Mirrors HF LlamaAttention with attention_mask=None, full f32."""
    B, S, H = x.shape
    hp = jax.lax.Precision.HIGHEST
    inv_freq = 1.0 / (rope_base ** (jnp.arange(0, head_dim, 2,
                                               dtype=jnp.float32) / head_dim))
    freqs = position_ids.astype(jnp.float32)[:, :, None] * inv_freq[None, None, :]
    emb = jnp.concatenate([freqs, freqs], axis=-1)
    cos = jnp.cos(emb)[:, None, :, :]
    sin = jnp.sin(emb)[:, None, :, :]

    def split(t):
        return t.reshape(B, S, n_heads, head_dim).transpose(0, 2, 1, 3)

    q = split(jnp.einsum('bsd,dk->bsk', x, wq, precision=hp))
    k = split(jnp.einsum('bsd,dk->bsk', x, wk, precision=hp))
    v = split(jnp.einsum('bsd,dk->bsk', x, wv, precision=hp))

    def rot_half(t):
        h = head_dim // 2
        return jnp.concatenate([-t[..., h:], t[..., :h]], axis=-1)

    q = q * cos + rot_half(q) * sin
    k = k * cos + rot_half(k) * sin

    scores = jnp.einsum('bhqd,bhkd->bhqk', q, k, precision=hp) / math.sqrt(head_dim)
    p = jax.nn.softmax(scores, axis=-1)
    attn = jnp.einsum('bhqk,bhkd->bhqd', p, v, precision=hp)
    attn = attn.transpose(0, 2, 1, 3).reshape(B, S, H)
    return jnp.einsum('bsd,dk->bsk', attn, wo, precision=hp)


if __name__ == "__main__":
    def make_inputs(B, S, H, seed, w_scale):
        key = jax.random.PRNGKey(seed)
        kx, kq, kk, kv_, ko = jax.random.split(key, 5)
        x = jax.random.normal(kx, (B, S, H), dtype=jnp.float32)
        pos = jnp.broadcast_to(jnp.arange(S, dtype=jnp.int32), (B, S))
        # Weights in "x @ W" orientation (== PyTorch nn.Linear weight.T).
        wq = w_scale * jax.random.normal(kq, (H, H), dtype=jnp.float32)
        wk = w_scale * jax.random.normal(kk, (H, H), dtype=jnp.float32)
        wv = w_scale * jax.random.normal(kv_, (H, H), dtype=jnp.float32)
        wo = w_scale * jax.random.normal(ko, (H, H), dtype=jnp.float32)
        return x, pos, wq, wk, wv, wo

    # ---- Case 1: tiny shapes (single-weight-block fallback path) ----
    B, S, H, nh, hd = 2, 8, 32, 4, 8
    x, pos, wq, wk, wv, wo = make_inputs(B, S, H, 0, 0.1)
    ref = llama_attention_ref(x, pos, wq, wk, wv, wo, n_heads=nh, head_dim=hd)

    out_f32 = jax.block_until_ready(
        llama_attention_pallas(x, pos, wq, wk, wv, wo, n_heads=nh, head_dim=hd,
                               compute_dtype=jnp.float32))
    assert out_f32.shape == (B, S, H)
    assert jnp.allclose(out_f32, ref, rtol=2e-2, atol=1e-2), (
        f"f32 path max abs err {jnp.max(jnp.abs(out_f32 - ref))}")

    out_bf16 = jax.block_until_ready(
        llama_attention_pallas(x, pos, wq, wk, wv, wo, n_heads=nh, head_dim=hd))
    assert out_bf16.shape == (B, S, H)
    assert jnp.allclose(out_bf16, ref, rtol=5e-2, atol=3e-2), (
        f"bf16 path max abs err {jnp.max(jnp.abs(out_bf16 - ref))}")

    # ---- Case 2: head_dim=128 exercises streamed-Wqkv + roll-based RoPE path ----
    B2, S2, H2, nh2, hd2 = 2, 16, 256, 2, 128
    x2, pos2, wq2, wk2, wv2, wo2 = make_inputs(B2, S2, H2, 1, 0.05)
    ref2 = llama_attention_ref(x2, pos2, wq2, wk2, wv2, wo2,
                               n_heads=nh2, head_dim=hd2)
    out2 = jax.block_until_ready(
        llama_attention_pallas(x2, pos2, wq2, wk2, wv2, wo2,
                               n_heads=nh2, head_dim=hd2))
    assert out2.shape == (B2, S2, H2)
    assert jnp.allclose(out2, ref2, rtol=8e-2, atol=8e-2), (
        f"streamed path max abs err {jnp.max(jnp.abs(out2 - ref2))}")

    print("KERNEL_OK")
</pallas_src>

<mosaic_0001>
module attributes {stable_mosaic.version = 11 : i64} {
  func.func @_qkv_rope_kernel(%arg0: i32, %arg1: i32, %arg2: i32, %arg3: memref<1x8x32xf32, #tpu.memory_space<vmem>>, %arg4: memref<1x8x8xf32, #tpu.memory_space<vmem>>, %arg5: memref<1x8x8xf32, #tpu.memory_space<vmem>>, %arg6: memref<32x96xf32, #tpu.memory_space<vmem>>, %arg7: memref<1x12x8x8xf32, #tpu.memory_space<vmem>>) attributes {dimension_semantics = [#tpu.dimension_semantics<parallel>, #tpu.dimension_semantics<parallel>, #tpu.dimension_semantics<arbitrary>], iteration_bounds = array<i64: 2, 1, 1>, scalar_prefetch = 0 : i64, scratch_operands = 0 : i64, tpu.core_type = #tpu.core_type<tc>, window_params = [{transform_indices = @transform_0, window_bounds = array<i64: 1, 8, 32>}, {transform_indices = @transform_1, window_bounds = array<i64: 1, 8, 8>}, {transform_indices = @transform_2, window_bounds = array<i64: 1, 8, 8>}, {transform_indices = @transform_3, window_bounds = array<i64: 32, 96>}, {transform_indices = @transform_4, window_bounds = array<i64: 1, 12, 8, 8>}]} {
    %c0 = arith.constant 0 : index
    %c0_0 = arith.constant 0 : index
    %c0_1 = arith.constant 0 : index
    %0 = vector.load %arg3[%c0, %c0_0, %c0_1] : memref<1x8x32xf32, #tpu.memory_space<vmem>>, vector<1x8x32xf32>
    %1 = vector.shape_cast %0 : vector<1x8x32xf32> to vector<8x32xf32>
    %c0_2 = arith.constant 0 : index
    %c0_3 = arith.constant 0 : index
    %2 = vector.load %arg6[%c0_2, %c0_3] : memref<32x96xf32, #tpu.memory_space<vmem>>, vector<32x96xf32>
    %cst = arith.constant dense<0.000000e+00> : vector<8x96xf32>
    %3 = tpu.matmul %1, %2, %cst {dimension_numbers = #tpu.dot_dimension_numbers<[1], [0], [0], [1], [0, 0, 1, 1], [], []>} : vector<8x32xf32>, vector<32x96xf32>, vector<8x96xf32> -> vector<8x96xf32>
    %4 = vector.shape_cast %3 : vector<8x96xf32> to vector<8x12x8xf32>
    %c0_4 = arith.constant 0 : index
    %c0_5 = arith.constant 0 : index
    %c0_6 = arith.constant 0 : index
    %5 = vector.load %arg4[%c0_4, %c0_5, %c0_6] : memref<1x8x8xf32, #tpu.memory_space<vmem>>, vector<1x8x8xf32>
    %6 = vector.shape_cast %5 : vector<1x8x8xf32> to vector<8x8xf32>
    %7 = vector.shape_cast %6 : vector<8x8xf32> to vector<8x1x8xf32>
    %c0_7 = arith.constant 0 : index
    %c0_8 = arith.constant 0 : index
    %c0_9 = arith.constant 0 : index
    %8 = vector.load %arg5[%c0_7, %c0_8, %c0_9] : memref<1x8x8xf32, #tpu.memory_space<vmem>>, vector<1x8x8xf32>
    %9 = vector.shape_cast %8 : vector<1x8x8xf32> to vector<8x8xf32>
    %10 = vector.shape_cast %9 : vector<8x8xf32> to vector<8x1x8xf32>
    %11 = vector.extract_strided_slice %4 {offsets = [0, 0, 0], sizes = [8, 4, 8], strides = [1, 1, 1]} : vector<8x12x8xf32> to vector<8x4x8xf32>
    %12 = vector.extract_strided_slice %11 {offsets = [0, 0, 4], sizes = [8, 4, 4], strides = [1, 1, 1]} : vector<8x4x8xf32> to vector<8x4x4xf32>
    %13 = vector.extract_strided_slice %11 {offsets = [0, 0, 0], sizes = [8, 4, 4], strides = [1, 1, 1]} : vector<8x4x8xf32> to vector<8x4x4xf32>
    %14 = tpu.concatenate %12, %13 in 2 : vector<8x4x4xf32>, vector<8x4x4xf32> -> vector<8x4x8xf32>
    %15 = vector.broadcast %7 : vector<8x1x8xf32> to vector<8x4x8xf32>
    %16 = arith.mulf %11, %15 : vector<8x4x8xf32>
    %17 = vector.broadcast %10 : vector<8x1x8xf32> to vector<8x4x8xf32>
    %18 = arith.mulf %14, %17 : vector<8x4x8xf32>
    %19 = arith.addf %16, %18 : vector<8x4x8xf32>
    %20 = vector.extract_strided_slice %4 {offsets = [0, 4, 0], sizes = [8, 4, 8], strides = [1, 1, 1]} : vector<8x12x8xf32> to vector<8x4x8xf32>
    %21 = vector.extract_strided_slice %20 {offsets = [0, 0, 4], sizes = [8, 4, 4], strides = [1, 1, 1]} : vector<8x4x8xf32> to vector<8x4x4xf32>
    %22 = vector.extract_strided_slice %20 {offsets = [0, 0, 0], sizes = [8, 4, 4], strides = [1, 1, 1]} : vector<8x4x8xf32> to vector<8x4x4xf32>
    %23 = tpu.concatenate %21, %22 in 2 : vector<8x4x4xf32>, vector<8x4x4xf32> -> vector<8x4x8xf32>
    %24 = vector.broadcast %7 : vector<8x1x8xf32> to vector<8x4x8xf32>
    %25 = arith.mulf %20, %24 : vector<8x4x8xf32>
    %26 = vector.broadcast %10 : vector<8x1x8xf32> to vector<8x4x8xf32>
    %27 = arith.mulf %23, %26 : vector<8x4x8xf32>
    %28 = arith.addf %25, %27 : vector<8x4x8xf32>
    %29 = vector.extract_strided_slice %4 {offsets = [0, 8, 0], sizes = [8, 4, 8], strides = [1, 1, 1]} : vector<8x12x8xf32> to vector<8x4x8xf32>
    %30 = tpu.concatenate %19, %28, %29 in 1 : vector<8x4x8xf32>, vector<8x4x8xf32>, vector<8x4x8xf32> -> vector<8x12x8xf32>
    %31 = tpu.transpose %30, [1, 0, 2] : vector<8x12x8xf32> -> vector<12x8x8xf32>
    %c0_10 = arith.constant 0 : index
    %c0_11 = arith.constant 0 : index
    %c0_12 = arith.constant 0 : index
    %c0_13 = arith.constant 0 : index
    %32 = vector.load %arg7[%c0_10, %c0_11, %c0_12, %c0_13] : memref<1x12x8x8xf32, #tpu.memory_space<vmem>>, vector<1x12x8x8xf32>
    %33 = vector.shape_cast %32 : vector<1x12x8x8xf32> to vector<12x8x8xf32>
    %34 = vector.shape_cast %31 : vector<12x8x8xf32> to vector<1x12x8x8xf32>
    tpu.vector_store %arg7[%c0_10, %c0_11, %c0_12, %c0_13], %34 {strides = array<i32>} : memref<1x12x8x8xf32, #tpu.memory_space<vmem>>, vector<1x12x8x8xf32>,
    return
  }
  func.func @transform_0(%arg0: i32, %arg1: i32, %arg2: i32) -> (i32, i32, i32) {
    %c0_i32 = arith.constant 0 : i32
    %c0_i32_0 = arith.constant 0 : i32
    return %arg0, %arg1, %c0_i32 : i32, i32, i32
  }
  func.func @transform_1(%arg0: i32, %arg1: i32, %arg2: i32) -> (i32, i32, i32) {
    %c0_i32 = arith.constant 0 : i32
    %c0_i32_0 = arith.constant 0 : i32
    return %arg0, %arg1, %c0_i32 : i32, i32, i32
  }
  func.func @transform_2(%arg0: i32, %arg1: i32, %arg2: i32) -> (i32, i32, i32) {
    %c0_i32 = arith.constant 0 : i32
    %c0_i32_0 = arith.constant 0 : i32
    return %arg0, %arg1, %c0_i32 : i32, i32, i32
  }
  func.func @transform_3(%arg0: i32, %arg1: i32, %arg2: i32) -> (i32, i32) {
    %c0_i32 = arith.constant 0 : i32
    %c0_i32_0 = arith.constant 0 : i32
    return %c0_i32, %arg2 : i32, i32
  }
  func.func @transform_4(%arg0: i32, %arg1: i32, %arg2: i32) -> (i32, i32, i32, i32) {
    %c0_i32 = arith.constant 0 : i32
    %c0_i32_0 = arith.constant 0 : i32
    return %arg0, %arg2, %arg1, %c0_i32 : i32, i32, i32, i32
  }
}

</mosaic_0001>

<llo_original>
// kernel: tpu_custom_call.1
$region0: #{tpu_custom_call.1}
  #allocation0 [shape = 'u32[]', space=smem, size = 0x4, offset = 0x4, fixed_abs, tag = 'smem constant byte address 0x4 - core index']
  #allocation1 [shape = 'u32[144,128]{1,0:T(1,128)}', space=vmem, size = 0x12000, scoped, tag = 'internal scratch']
  %s0 = inlined_call_operand.hbm [shape: f32[2,8,32], index: 0, kind: input, shape index: {}]
  %s1 = inlined_call_operand.hbm [shape: f32[2,8,8], index: 1, kind: input, shape index: {}]
  %s2 = inlined_call_operand.hbm [shape: f32[2,8,8], index: 2, kind: input, shape index: {}]
  %s3 = inlined_call_operand.hbm [shape: f32[32,96], index: 3, kind: input, shape index: {}]
  %s4 = inlined_call_operand.hbm [shape: f32[2,12,8,8], index: 4, kind: output, shape index: {}]
  %s5 = sld [smem:[#allocation0]]
  $region65: #{tpu_custom_call.1} parent=0
    _
  %s7 = ssub.s32 1, %s5
  %s8 = scalar_select 0, %s7, %s5
  $region1: #{tpu_custom_call.1} parent=0
    #allocation2 [shape = 'u8[8192]{0}', space=vmem, size = 0x2000, scoped, tag = 'input window, operand 0']
    #allocation3 [shape = 's32[2]{0}', space=sflag, size = 0x8, scoped, tag = 'scoped memory for tpu_custom_call.1']
    #allocation4 [shape = 's32[2]{0}', space=sflag, size = 0x8, scoped, tag = 'scoped memory for tpu_custom_call.1']
    #allocation5 [shape = 'u8[8192]{0}', space=vmem, size = 0x2000, scoped, tag = 'input window, operand 1']
    #allocation6 [shape = 's32[2]{0}', space=sflag, size = 0x8, scoped, tag = 'scoped memory for tpu_custom_call.1']
    #allocation7 [shape = 'u8[8192]{0}', space=vmem, size = 0x2000, scoped, tag = 'input window, operand 2']
    #allocation8 [shape = 'u8[16384]{0}', space=vmem, size = 0x4000, scoped, tag = 'input window, operand 3, single buffered']
    #allocation9 [shape = 's32[1]{0}', space=sflag, size = 0x4, scoped, tag = 'scoped memory for tpu_custom_call.1']
    #allocation10 [shape = 'u8[98304]{0}', space=vmem, size = 0x18000, scoped, tag = 'output window, operand 0']
    %9 = vsyncpa [#allocation3], 0
    %s10 = scalar_lea.sflag [#allocation3], 1
    %11 = vsyncpa %s10, 0
    %12 = vsyncpa [#allocation6], 0
    %s13 = scalar_lea.sflag [#allocation6], 1
    %14 = vsyncpa %s13, 0
    %15 = vsyncpa [#allocation9], 0
    %16 = vsyncpa [#allocation4], 0
    %s17 = scalar_lea.sflag [#allocation4], 1
    %18 = vsyncpa %s17, 0
    loop: start=0, step=1, limit=4
    $region2: #{tpu_custom_call.1} parent=1 // loop_pre_header
      _
    $region3: #{tpu_custom_call.1} parent=1 // loop_header
      %s20 = sphi 0, %s24
      %p21 = scmp.ge.s32.totalorder %s20, 4
      %s27 = sphi 0, %s46
      %s28 = sphi 0, %s42
      %s29 = sphi 0, %s38
      %s30 = sphi 0, %s27
      %s31 = sphi 0, %s28
      %s32 = sphi 0, %s29
      %s33 = sphi 0, %s30
      %s34 = sphi 0, %s31
      %s35 = sphi 0, %s32
      %s51 = sphi 0, %s53
      %s54 = sphi 0, %s51
      %s55 = sphi 0, %s54
      %s71 = sphi 0, %s55
      %s79 = sphi 0, %s81
      %s82 = sphi 0, %s79
      %s83 = sphi 0, %s82
      %s99 = sphi 0, %s83
      %s107 = sphi 0, %s109
      %s110 = sphi 0, %s107
      %s111 = sphi 0, %s110
      %s127 = sphi 0, %s111
      %s133 = sphi 0, %s135
      %s136 = sphi 0, %s133
      %s137 = sphi 0, %s136
      %s153 = sphi 0, %s137
      %s163 = sphi 0, %s165
      %s166 = sphi 0, %s163
      %s167 = sphi 0, %s166
      %s183 = sphi 0, %s167
    $region4: #{tpu_custom_call.1} parent=1 // loop_header_branch
      %23 = sbr.rel (%p21) target = $region8
    $region5: #{tpu_custom_call.1} parent=1 // loop_body
      %s25 = ssub.s32 %s20, 1
      %s26 = ssub.s32 %s20, 2
      %s36 = sadd.s32 1, %s29
      %p37 = scmp.ge.s32.totalorder %s36, 1
      %s38 = scalar_select %p37, 0, %s36
      %s39 = sadd.s32 1, %s28
      %s40 = scalar_select %p37, %s39, %s28
      %p41 = scmp.ge.s32.totalorder %s40, 1
      %s42 = scalar_select %p41, 0, %s40
      %s43 = sadd.s32 1, %s27
      %s44 = scalar_select %p41, %s43, %s27
      %p45 = scmp.ge.s32.totalorder %s44, 2
      %s46 = scalar_select %p45, 0, %s44
      %s47 = ssub.s32 %s27, %s46
      %s48 = ssub.s32 %s28, %s42
      %s49 = sor.u32 %s47, %s48
      %p50 = scmp.eq.s32.totalorder %s49, 0
      %s52 = sadd.s32 %s51, 1
      %s53 = scalar_select %p50, %s51, %s52
      %p56 = pneg %p50
      %p57 = scmp.eq.s32.totalorder %s20, 1
      %p58 = por %p56, %p57
      %p59 = scmp.ne.s32.totalorder %s51, %s54
      %p60 = scmp.eq.s32.totalorder %s20, 0
      %p61 = por %p59, %p60
      %p62 = scmp.ne.s32.totalorder %s51, %s54
      %p63 = scmp.eq.s32.totalorder %s25, 1
      %p64 = por %p62, %p63
      %p65 = scmp.ne.s32.totalorder %s54, %s55
      %p66 = scmp.eq.s32.totalorder %s25, 0
      %p67 = por %p65, %p66
      %p68 = scmp.ne.s32.totalorder %s54, %s55
      %p69 = scmp.eq.s32.totalorder %s26, 1
      %p70 = por %p68, %p69
      %p72 = scmp.ne.s32.totalorder %s55, %s71
      %p73 = scmp.eq.s32.totalorder %s26, 0
      %p74 = por %p72, %p73
      %s75 = ssub.s32 %s27, %s46
      %s76 = ssub.s32 %s28, %s42
      %s77 = sor.u32 %s75, %s76
      %p78 = scmp.eq.s32.totalorder %s77, 0
      %s80 = sadd.s32 %s79, 1
      %s81 = scalar_select %p78, %s79, %s80
      %p84 = pneg %p78
      %p85 = scmp.eq.s32.totalorder %s20, 1
      %p86 = por %p84, %p85
      %p87 = scmp.ne.s32.totalorder %s79, %s82
      %p88 = scmp.eq.s32.totalorder %s20, 0
      %p89 = por %p87, %p88
      %p90 = scmp.ne.s32.totalorder %s79, %s82
      %p91 = scmp.eq.s32.totalorder %s25, 1
      %p92 = por %p90, %p91
      %p93 = scmp.ne.s32.totalorder %s82, %s83
      %p94 = scmp.eq.s32.totalorder %s25, 0
      %p95 = por %p93, %p94
      %p96 = scmp.ne.s32.totalorder %s82, %s83
      %p97 = scmp.eq.s32.totalorder %s26, 1
      %p98 = por %p96, %p97
      %p100 = scmp.ne.s32.totalorder %s83, %s99
      %p101 = scmp.eq.s32.totalorder %s26, 0
      %p102 = por %p100, %p101
      %s103 = ssub.s32 %s27, %s46
      %s104 = ssub.s32 %s28, %s42
      %s105 = sor.u32 %s103, %s104
      %p106 = scmp.eq.s32.totalorder %s105, 0
      %s108 = sadd.s32 %s107, 1
      %s109 = scalar_select %p106, %s107, %s108
      %p112 = pneg %p106
      %p113 = scmp.eq.s32.totalorder %s20, 1
      %p114 = por %p112, %p113
      %p115 = scmp.ne.s32.totalorder %s107, %s110
      %p116 = scmp.eq.s32.totalorder %s20, 0
      %p117 = por %p115, %p116
      %p118 = scmp.ne.s32.totalorder %s107, %s110
      %p119 = scmp.eq.s32.totalorder %s25, 1
      %p120 = por %p118, %p119
      %p121 = scmp.ne.s32.totalorder %s110, %s111
      %p122 = scmp.eq.s32.totalorder %s25, 0
      %p123 = por %p121, %p122
      %p124 = scmp.ne.s32.totalorder %s110, %s111
      %p125 = scmp.eq.s32.totalorder %s26, 1
      %p126 = por %p124, %p125
      %p128 = scmp.ne.s32.totalorder %s111, %s127
      %p129 = scmp.eq.s32.totalorder %s26, 0
      %p130 = por %p128, %p129
      %s131 = ssub.s32 %s29, %s38
      %p132 = scmp.eq.s32.totalorder %s131, 0
      %s134 = sadd.s32 %s133, 1
      %s135 = scalar_select %p132, %s133, %s134
      %p138 = pneg %p132
      %p139 = scmp.eq.s32.totalorder %s20, 1
      %p140 = por %p138, %p139
      %p141 = scmp.ne.s32.totalorder %s133, %s136
      %p142 = scmp.eq.s32.totalorder %s20, 0
      %p143 = por %p141, %p142
      %p144 = scmp.ne.s32.totalorder %s133, %s136
      %p145 = scmp.eq.s32.totalorder %s25, 1
      %p146 = por %p144, %p145
      %p147 = scmp.ne.s32.totalorder %s136, %s137
      %p148 = scmp.eq.s32.totalorder %s25, 0
      %p149 = por %p147, %p148
      %p150 = scmp.ne.s32.totalorder %s136, %s137
      %p151 = scmp.eq.s32.totalorder %s26, 1
      %p152 = por %p150, %p151
      %p154 = scmp.ne.s32.totalorder %s137, %s153
      %p155 = scmp.eq.s32.totalorder %s26, 0
      %p156 = por %p154, %p155
      %s157 = ssub.s32 %s27, %s46
      %s158 = ssub.s32 %s29, %s38
      %s159 = sor.u32 %s157, %s158
      %s160 = ssub.s32 %s28, %s42
      %s161 = sor.u32 %s159, %s160
      %p162 = scmp.eq.s32.totalorder %s161, 0
      %s164 = sadd.s32 %s163, 1
      %s165 = scalar_select %p162, %s163, %s164
      %p168 = pneg %p162
      %p169 = scmp.eq.s32.totalorder %s20, 1
      %p170 = por %p168, %p169
      %p171 = scmp.ne.s32.totalorder %s163, %s166
      %p172 = scmp.eq.s32.totalorder %s20, 0
      %p173 = por %p171, %p172
      %p174 = scmp.ne.s32.totalorder %s163, %s166
      %p175 = scmp.eq.s32.totalorder %s25, 1
      %p176 = por %p174, %p175
      %p177 = scmp.ne.s32.totalorder %s166, %s167
      %p178 = scmp.eq.s32.totalorder %s25, 0
      %p179 = por %p177, %p178
      %p180 = scmp.ne.s32.totalorder %s166, %s167
      %p181 = scmp.eq.s32.totalorder %s26, 1
      %p182 = por %p180, %p181
      %p184 = scmp.ne.s32.totalorder %s167, %s183
      %p185 = scmp.eq.s32.totalorder %s26, 0
      %p186 = por %p184, %p185
      %p187 = scmp.le.s32.totalorder 1, %s20
      %p188 = scmp.lt.s32.totalorder %s20, 3
      %p189 = pnand %p187, %p188
      %p190 = pneg %p189
      // Predicated region
      $region9: #{tpu_custom_call.1} parent=5 // pred_check
        _
      $region10: #{tpu_custom_call.1} parent=5 // pred_check_branch
        %192 = sbr.rel (%p189) target = $region12
      $region11: #{tpu_custom_call.1} parent=5 // pred_region
        %s193 = ssub.s32 %s20, 1
        // Predicated region
        $region13: #{tpu_custom_call.1} parent=11 // pred_check
          %p194 = pneg %p149
        $region14: #{tpu_custom_call.1} parent=11 // pred_check_branch
          %196 = sbr.rel (%p194) target = $region16
        $region15: #{tpu_custom_call.1} parent=11 // pred_region
          %s198 = ssub.s32 512, 512
          %199 = vsyncadd [#allocation9], %s198
          %s200 = smul.addr %s32, 128
          %s201 = scalar_lea.hbm %s3, %s200
          %s202 = sshll.u32 [#allocation8], 4
          %s203 = int_to_ptr.vmem [resolvable:$true] %s202
          %208 = dma.hbm_to_vmem [thread:$0]  %s201, 512, %s203, [#allocation9], 128, 128, 8
        $region16: #{tpu_custom_call.1} parent=11 // pred_fallthru
          _
      $region12: #{tpu_custom_call.1} parent=5 // pred_fallthru
        _
      %p209 = scmp.lt.s32.totalorder %s20, 2
      // Predicated region
      $region17: #{tpu_custom_call.1} parent=5 // pred_check
        %p210 = pneg %p209
      $region18: #{tpu_custom_call.1} parent=5 // pred_check_branch
        %212 = sbr.rel (%p210) target = $region20
      $region19: #{tpu_custom_call.1} parent=5 // pred_region
        // Predicated region
        $region21: #{tpu_custom_call.1} parent=19 // pred_check
          %p213 = pneg %p61
        $region22: #{tpu_custom_call.1} parent=19 // pred_check_branch
          %215 = sbr.rel (%p213) target = $region24
        $region23: #{tpu_custom_call.1} parent=19 // pred_region
          %s216 = sand.u32 %s51, 1
          %s217 = scalar_lea.sflag [#allocation3], %s216
          %s218 = sand.u32 %s51, 1
          %s219 = smul.addr %s218, 8
          %s220 = scalar_lea.vmem [#allocation2], %s219
          %s222 = ssub.s32 128, 128
          %223 = vsyncadd %s217, %s222
          %s224 = sadd.s32 %s28, %s27
          %s225 = smul.addr %s224, 128
          %s226 = scalar_lea.hbm %s0, %s225
          %s228 = sshll.u32 %s220, 4
          %s229 = int_to_ptr.vmem [resolvable:$true] %s228
          %231 = dma.hbm_to_vmem [thread:$0]  %s226, 128, %s229, %s217
        $region24: #{tpu_custom_call.1} parent=19 // pred_fallthru
          _
        // Predicated region
        $region25: #{tpu_custom_call.1} parent=19 // pred_check
          %p232 = pneg %p89
        $region26: #{tpu_custom_call.1} parent=19 // pred_check_branch
          %234 = sbr.rel (%p232) target = $region28
        $region27: #{tpu_custom_call.1} parent=19 // pred_region
          %s235 = sand.u32 %s20, 1
          %s236 = scalar_lea.sflag [#allocation6], %s235
          %s237 = sand.u32 %s79, 1
          %s238 = smul.addr %s237, 8
          %s239 = scalar_lea.vmem [#allocation5], %s238
          %s241 = ssub.s32 128, 128
          %242 = vsyncadd %s236, %s241
          %s243 = sadd.s32 %s28, %s27
          %s244 = smul.addr %s243, 128
          %s245 = scalar_lea.hbm %s1, %s244
          %s247 = sshll.u32 %s239, 4
          %s248 = int_to_ptr.vmem [resolvable:$true] %s247
          %250 = dma.hbm_to_vmem [thread:$0]  %s245, 128, %s248, %s236
        $region28: #{tpu_custom_call.1} parent=19 // pred_fallthru
          _
        // Predicated region
        $region29: #{tpu_custom_call.1} parent=19 // pred_check
          %p251 = pneg %p117
        $region30: #{tpu_custom_call.1} parent=19 // pred_check_branch
          %253 = sbr.rel (%p251) target = $region32
        $region31: #{tpu_custom_call.1} parent=19 // pred_region
          %s254 = sand.u32 %s20, 1
          %s255 = scalar_lea.sflag [#allocation6], %s254
          %s256 = sand.u32 %s107, 1
          %s257 = smul.addr %s256, 8
          %s258 = scalar_lea.vmem [#allocation7], %s257
          %s260 = ssub.s32 128, 128
          %261 = vsyncadd %s255, %s260
          %s262 = sadd.s32 %s28, %s27
          %s263 = smul.addr %s262, 128
          %s264 = scalar_lea.hbm %s2, %s263
          %s266 = sshll.u32 %s258, 4
          %s267 = int_to_ptr.vmem [resolvable:$true] %s266
          %269 = dma.hbm_to_vmem [thread:$0]  %s264, 128, %s267, %s255
        $region32: #{tpu_custom_call.1} parent=19 // pred_fallthru
          _
      $region20: #{tpu_custom_call.1} parent=5 // pred_fallthru
        _
      %p270 = scmp.le.s32.totalorder 1, %s20
      %p271 = scmp.lt.s32.totalorder %s20, 3
      %p272 = pnand %p270, %p271
      %p273 = pneg %p272
      // Predicated region
      $region33: #{tpu_custom_call.1} parent=5 // pred_check
        _
      $region34: #{tpu_custom_call.1} parent=5 // pred_check_branch
        %275 = sbr.rel (%p272) target = $region36
      $region35: #{tpu_custom_call.1} parent=5 // pred_region
        %s276 = ssub.s32 %s20, 1
        %s277 = sand.u32 %s54, 1
        %s278 = scalar_lea.sflag [#allocation3], %s277
        %s279 = sand.u32 %s54, 1
        %s280 = smul.addr %s279, 8
        %s281 = scalar_lea.vmem [#allocation2], %s280
        // Predicated region
        $region37: #{tpu_custom_call.1} parent=35 // pred_check
          %p282 = pneg %p67
        $region38: #{tpu_custom_call.1} parent=35 // pred_check_branch
          %284 = sbr.rel (%p282) target = $region40
        $region39: #{tpu_custom_call.1} parent=35 // pred_region
          %285 = dma.done %s278, 128
        $region40: #{tpu_custom_call.1} parent=35 // pred_fallthru
          _
        %s286 = sand.u32 %s25, 1
        %s287 = scalar_lea.sflag [#allocation6], %s286
        %s288 = sand.u32 %s82, 1
        %s289 = smul.addr %s288, 8
        %s290 = scalar_lea.vmem [#allocation5], %s289
        // Predicated region
        $region41: #{tpu_custom_call.1} parent=35 // pred_check
          %p291 = pneg %p95
        $region42: #{tpu_custom_call.1} parent=35 // pred_check_branch
          %293 = sbr.rel (%p291) target = $region44
        $region43: #{tpu_custom_call.1} parent=35 // pred_region
          %294 = dma.done %s287, 128
        $region44: #{tpu_custom_call.1} parent=35 // pred_fallthru
          _
        %s295 = sand.u32 %s25, 1
        %s296 = scalar_lea.sflag [#allocation6], %s295
        %s297 = sand.u32 %s110, 1
        %s298 = smul.addr %s297, 8
        %s299 = scalar_lea.vmem [#allocation7], %s298
        // Predicated region
        $region45: #{tpu_custom_call.1} parent=35 // pred_check
          %p300 = pneg %p123
        $region46: #{tpu_custom_call.1} parent=35 // pred_check_branch
          %302 = sbr.rel (%p300) target = $region48
        $region47: #{tpu_custom_call.1} parent=35 // pred_region
          %303 = dma.done %s296, 128
        $region48: #{tpu_custom_call.1} parent=35 // pred_fallthru
          _
        // Predicated region
        $region49: #{tpu_custom_call.1} parent=35 // pred_check
          %p304 = pneg %p149
        $region50: #{tpu_custom_call.1} parent=35 // pred_check_branch
          %306 = sbr.rel (%p304) target = $region52
        $region51: #{tpu_custom_call.1} parent=35 // pred_region
          %307 = dma.done [#allocation9], 512
        $region52: #{tpu_custom_call.1} parent=35 // pred_fallthru
          _
        %s308 = sand.u32 %s54, 1
        %s309 = scalar_lea.sflag [#allocation3], %s308
        %s310 = sand.u32 %s54, 1
        %s311 = smul.addr %s310, 8
        %s312 = scalar_lea.vmem [#allocation2], %s311
        %p313 = pneg %p67
        %p314 = pneg %p64
        %s315 = sand.u32 %s25, 1
        %s316 = scalar_lea.sflag [#allocation6], %s315
        %s317 = sand.u32 %s82, 1
        %s318 = smul.addr %s317, 8
        %s319 = scalar_lea.vmem [#allocation5], %s318
        %p320 = pneg %p95
        %p321 = pneg %p92
        %s322 = sand.u32 %s25, 1
        %s323 = scalar_lea.sflag [#allocation6], %s322
        %s324 = sand.u32 %s110, 1
        %s325 = smul.addr %s324, 8
        %s326 = scalar_lea.vmem [#allocation7], %s325
        %p327 = pneg %p123
        %p328 = pneg %p120
        %p329 = pneg %p149
        %p330 = pneg %p146
        %p331 = pneg %p179
        %p332 = pneg %p176
        %s333 = sand.u32 %s166, 1
        %s334 = scalar_lea.sflag [#allocation4], %s333
        %s335 = sand.u32 %s166, 1
        %s336 = smul.addr %s335, 96
        %s337 = scalar_lea.vmem [#allocation10], %s336
        %s338 = smul.u32 12, %s32
        %v339 = vld [vmem:[%s281] sm:$0xff]
        %v340 = vld [vmem:[#allocation8] sm:$0xff]
        %v341 = vld [vmem:[#allocation8 + $0x8] sm:$0xff]
        %v342 = vld [vmem:[#allocation8 + $0x10] sm:$0xff]
        %v343 = vld [vmem:[#allocation8 + $0x18] sm:$0xff]
        %vm344 = vcmask 261120
        %v346 = vsel %vm344, %v339, 0
        %348 = vmatprep.subr.mxu0 0.0
        %349 = vmatpush1.msra.mxu0 %v340
        %350 = vmatprep.subr.mxu0 0.0
        %351 = vmatpush1.msra.mxu0 %v341
        %352 = vmatprep.subr.mxu0 0.0
        %353 = vmatpush1.msra.mxu0 %v342
        %354 = vmatprep.subr.mxu0 0.0
        %355 = vmatpush1.msra.mxu0 %v343
        %356 = vmatprep.subr.mxu0 0.0
        %357 = vmatpush1.msra.mxu0 0.0
        %358 = vmatprep.subr.mxu0 0.0
        %359 = vmatpush1.msra.mxu0 0.0
        %360 = vmatprep.subr.mxu0 0.0
        %361 = vmatpush1.msra.mxu0 0.0
        %362 = vmatprep.subr.mxu0 0.0
        %363 = vmatpush1.msra.mxu0 0.0
        %364 = vmatprep.subr.mxu0 0.0
        %365 = vmatpush1.msra.mxu0 0.0
        %366 = vmatprep.subr.mxu0 0.0
        %367 = vmatpush1.msra.mxu0 0.0
        %368 = vmatprep.subr.mxu0 0.0
        %369 = vmatpush1.msra.mxu0 0.0
        %370 = vmatprep.subr.mxu0 0.0
        %371 = vmatpush1.msra.mxu0 0.0
        %372 = vmatprep.subr.mxu0 0.0
        %373 = vmatpush1.msra.mxu0 0.0
        %374 = vmatprep.subr.mxu0 0.0
        %375 = vmatpush1.msra.mxu0 0.0
        %376 = vmatprep.subr.mxu0 0.0
        %377 = vmatpush1.msra.mxu0 0.0
        %378 = vmatprep.subr.mxu0 0.0
        %379 = vmatpush1.msra.mxu0 0.0
        %380 = vmatprep.subr.mxu0 0.0
        %381 = vmatpush1.msra.mxu0 0.0
        %382 = vmatprep.subr.mxu0 0.0
        %383 = vmatpush1.msra.mxu0 0.0
        %384 = vmatprep.subr.mxu0 0.0
        %385 = vmatpush1.msra.mxu0 0.0
        %386 = vmatprep.subr.mxu0 0.0
        %387 = vmatpush1.msra.mxu0 0.0
        %388 = vmatprep.subr.mxu0 0.0
        %389 = vmatpush1.msra.mxu0 0.0
        %390 = vmatprep.subr.mxu0 0.0
        %391 = vmatpush1.msra.mxu0 0.0
        %392 = vmatprep.subr.mxu0 0.0
        %393 = vmatpush1.msra.mxu0 0.0
        %394 = vmatprep.subr.mxu0 0.0
        %395 = vmatpush1.msra.mxu0 0.0
        %396 = vmatprep.subr.mxu0 0.0
        %397 = vmatpush1.msra.mxu0 0.0
        %398 = vmatprep.subr.mxu0 0.0
        %399 = vmatpush1.msra.mxu0 0.0
        %400 = vmatprep.subr.mxu0 0.0
        %401 = vmatpush1.msra.mxu0 0.0
        %402 = vmatprep.subr.mxu0 0.0
        %403 = vmatpush1.msra.mxu0 0.0
        %404 = vmatprep.subr.mxu0 0.0
        %405 = vmatpush1.msra.mxu0 0.0
        %406 = vmatprep.subr.mxu0 0.0
        %407 = vmatpush1.msra.mxu0 0.0
        %408 = vmatprep.subr.mxu0 0.0
        %409 = vmatpush1.msra.mxu0 0.0
        %410 = vmatprep.subr.mxu0 0.0
        %411 = vmatpush1.msra.mxu0 0.0
        %412 = vmatprep.mubr.f32.mxu0 0.0
        %413 = vmatmul.mubr.f32.gmra.mrb[0].mxu0 %v346
        %v414 = vpop.f32.mrb[0].mxu0
        %v415 = vadd.f32 0.0, %v414
        %v416 = vpop.f32.mrb[0].mxu0
        %417 = vdwg.mxu0
        %419 = vrot.lane.b32.xlu0 %v415, 120
        %v420 = vpop.permute.xlu0 %419
        %422 = vrot.lane.b32.xlu0 %v415, 112
        %v423 = vpop.permute.xlu0 %422
        %425 = vrot.lane.b32.xlu0 %v415, 104
        %v426 = vpop.permute.xlu0 %425
        %428 = vrot.lane.b32.xlu0 %v415, 96
        %v429 = vpop.permute.xlu0 %428
        %431 = vrot.lane.b32.xlu0 %v415, 88
        %v432 = vpop.permute.xlu0 %431
        %434 = vrot.lane.b32.xlu0 %v415, 80
        %v435 = vpop.permute.xlu0 %434
        %437 = vrot.lane.b32.xlu0 %v415, 72
        %v438 = vpop.permute.xlu0 %437
        %440 = vrot.lane.b32.xlu0 %v415, 64
        %v441 = vpop.permute.xlu0 %440
        %443 = vrot.lane.b32.xlu0 %v415, 56
        %v444 = vpop.permute.xlu0 %443
        %446 = vrot.lane.b32.xlu0 %v415, 48
        %v447 = vpop.permute.xlu0 %446
        %449 = vrot.lane.b32.xlu0 %v415, 40
        %v450 = vpop.permute.xlu0 %449
        %v452 = vcombine.low %v415, %v423
        %v453 = vcombine.high %v415, %v423
        %v455 = vunpack.c.l.s4 1983009808
        %v456 = vunpack.c.0.s8 %v455
        %v457 = vlaneseq
        %v458 = vshrl.u32 %v457, 7
        %v459 = vsub.s32 %v456, %v458
        %v460 = vrot.slane %v452, %v459
        %v462 = vunpack.c.l.s4 1983009808
        %v463 = vunpack.c.0.s8 %v462
        %v464 = vlaneseq
        %v465 = vshrl.u32 %v464, 7
        %v466 = vsub.s32 %v463, %v465
        %v467 = vrot.slane %v453, %v466
        %v468 = vcombine.low %v420, %v426
        %v469 = vcombine.high %v420, %v426
        %v471 = vunpack.c.l.s4 1983009808
        %v472 = vunpack.c.0.s8 %v471
        %v473 = vlaneseq
        %v474 = vshrl.u32 %v473, 7
        %v475 = vsub.s32 %v472, %v474
        %v476 = vrot.slane %v468, %v475
        %v478 = vunpack.c.l.s4 1983009808
        %v479 = vunpack.c.0.s8 %v478
        %v480 = vlaneseq
        %v481 = vshrl.u32 %v480, 7
        %v482 = vsub.s32 %v479, %v481
        %v483 = vrot.slane %v469, %v482
        %v484 = vcombine.low %v429, %v435
        %v485 = vcombine.high %v429, %v435
        %v487 = vunpack.c.l.s4 1983009808
        %v488 = vunpack.c.0.s8 %v487
        %v489 = vlaneseq
        %v490 = vshrl.u32 %v489, 7
        %v491 = vsub.s32 %v488, %v490
        %v492 = vrot.slane %v484, %v491
        %v494 = vunpack.c.l.s4 1983009808
        %v495 = vunpack.c.0.s8 %v494
        %v496 = vlaneseq
        %v497 = vshrl.u32 %v496, 7
        %v498 = vsub.s32 %v495, %v497
        %v499 = vrot.slane %v485, %v498
        %v500 = vcombine.low %v432, %v438
        %v501 = vcombine.high %v432, %v438
        %v503 = vunpack.c.l.s4 1983009808
        %v504 = vunpack.c.0.s8 %v503
        %v505 = vlaneseq
        %v506 = vshrl.u32 %v505, 7
        %v507 = vsub.s32 %v504, %v506
        %v508 = vrot.slane %v500, %v507
        %v510 = vunpack.c.l.s4 1983009808
        %v511 = vunpack.c.0.s8 %v510
        %v512 = vlaneseq
        %v513 = vshrl.u32 %v512, 7
        %v514 = vsub.s32 %v511, %v513
        %v515 = vrot.slane %v501, %v514
        %v516 = vcombine.low %v460, %v476
        %v517 = vcombine.high %v460, %v476
        %v519 = vunpack.c.l.s4 1934713408
        %v520 = vunpack.c.0.s8 %v519
        %v521 = vlaneseq
        %v522 = vshrl.u32 %v521, 7
        %v523 = vsub.s32 %v520, %v522
        %v524 = vrot.slane %v516, %v523
        %v526 = vunpack.c.l.s4 1934713408
        %v527 = vunpack.c.0.s8 %v526
        %v528 = vlaneseq
        %v529 = vshrl.u32 %v528, 7
        %v530 = vsub.s32 %v527, %v529
        %v531 = vrot.slane %v517, %v530
        %v532 = vcombine.low %v467, %v483
        %v533 = vcombine.high %v467, %v483
        %v535 = vunpack.c.l.s4 1934713408
        %v536 = vunpack.c.0.s8 %v535
        %v537 = vlaneseq
        %v538 = vshrl.u32 %v537, 7
        %v539 = vsub.s32 %v536, %v538
        %v540 = vrot.slane %v532, %v539
        %v542 = vunpack.c.l.s4 1934713408
        %v543 = vunpack.c.0.s8 %v542
        %v544 = vlaneseq
        %v545 = vshrl.u32 %v544, 7
        %v546 = vsub.s32 %v543, %v545
        %v547 = vrot.slane %v533, %v546
        %v548 = vcombine.low %v492, %v508
        %v549 = vcombine.high %v492, %v508
        %v551 = vunpack.c.l.s4 1934713408
        %v552 = vunpack.c.0.s8 %v551
        %v553 = vlaneseq
        %v554 = vshrl.u32 %v553, 7
        %v555 = vsub.s32 %v552, %v554
        %v556 = vrot.slane %v548, %v555
        %v558 = vunpack.c.l.s4 1934713408
        %v559 = vunpack.c.0.s8 %v558
        %v560 = vlaneseq
        %v561 = vshrl.u32 %v560, 7
        %v562 = vsub.s32 %v559, %v561
        %v563 = vrot.slane %v549, %v562
        %v564 = vcombine.low %v499, %v515
        %v565 = vcombine.high %v499, %v515
        %v567 = vunpack.c.l.s4 1934713408
        %v568 = vunpack.c.0.s8 %v567
        %v569 = vlaneseq
        %v570 = vshrl.u32 %v569, 7
        %v571 = vsub.s32 %v568, %v570
        %v572 = vrot.slane %v564, %v571
        %v574 = vunpack.c.l.s4 1934713408
        %v575 = vunpack.c.0.s8 %v574
        %v576 = vlaneseq
        %v577 = vshrl.u32 %v576, 7
        %v578 = vsub.s32 %v575, %v577
        %v579 = vrot.slane %v565, %v578
        %v580 = vcombine.low %v524, %v556
        %v581 = vcombine.high %v524, %v556
        %v582 = vcombine.low %v531, %v563
        %v583 = vcombine.high %v531, %v563
        %v584 = vcombine.low %v540, %v572
        %v585 = vcombine.high %v540, %v572
        %v586 = vcombine.low %v547, %v579
        %v587 = vcombine.high %v547, %v579
        %v588 = vcombine.low %v441, %v447
        %v589 = vcombine.high %v441, %v447
        %v591 = vunpack.c.l.s4 1983009808
        %v592 = vunpack.c.0.s8 %v591
        %v593 = vlaneseq
        %v594 = vshrl.u32 %v593, 7
        %v595 = vsub.s32 %v592, %v594
        %v596 = vrot.slane %v588, %v595
        %v598 = vunpack.c.l.s4 1983009808
        %v599 = vunpack.c.0.s8 %v598
        %v600 = vlaneseq
        %v601 = vshrl.u32 %v600, 7
        %v602 = vsub.s32 %v599, %v601
        %v603 = vrot.slane %v589, %v602
        %v604 = vcombine.low %v444, %v450
        %v605 = vcombine.high %v444, %v450
        %v607 = vunpack.c.l.s4 1983009808
        %v608 = vunpack.c.0.s8 %v607
        %v609 = vlaneseq
        %v610 = vshrl.u32 %v609, 7
        %v611 = vsub.s32 %v608, %v610
        %v612 = vrot.slane %v604, %v611
        %v614 = vunpack.c.l.s4 1983009808
        %v615 = vunpack.c.0.s8 %v614
        %v616 = vlaneseq
        %v617 = vshrl.u32 %v616, 7
        %v618 = vsub.s32 %v615, %v617
        %v619 = vrot.slane %v605, %v618
        %v620 = vcombine.low %v596, %v612
        %v621 = vcombine.high %v596, %v612
        %v623 = vunpack.c.l.s4 1934713408
        %v624 = vunpack.c.0.s8 %v623
        %v625 = vlaneseq
        %v626 = vshrl.u32 %v625, 7
        %v627 = vsub.s32 %v624, %v626
        %v628 = vrot.slane %v620, %v627
        %v630 = vunpack.c.l.s4 1934713408
        %v631 = vunpack.c.0.s8 %v630
        %v632 = vlaneseq
        %v633 = vshrl.u32 %v632, 7
        %v634 = vsub.s32 %v631, %v633
        %v635 = vrot.slane %v621, %v634
        %v636 = vcombine.low %v603, %v619
        %v637 = vcombine.high %v603, %v619
        %v639 = vunpack.c.l.s4 1934713408
        %v640 = vunpack.c.0.s8 %v639
        %v641 = vlaneseq
        %v642 = vshrl.u32 %v641, 7
        %v643 = vsub.s32 %v640, %v642
        %v644 = vrot.slane %v636, %v643
        %v646 = vunpack.c.l.s4 1934713408
        %v647 = vunpack.c.0.s8 %v646
        %v648 = vlaneseq
        %v649 = vshrl.u32 %v648, 7
        %v650 = vsub.s32 %v647, %v649
        %v651 = vrot.slane %v637, %v650
        %v652 = vcombine.high %v628, 0.0
        %v653 = vcombine.high %v635, 0.0
        %v654 = vcombine.high %v644, 0.0
        %v655 = vcombine.high %v651, 0.0
        %v656 = vld [vmem:[%s290] sm:$0xff]
        %v658 = vcombine.high %v656, %v656
        %v660 = vunpack.c.l.s4 1966171168
        %v661 = vunpack.c.0.s8 %v660
        %v662 = vlaneseq
        %v663 = vshrl.u32 %v662, 7
        %v664 = vsub.s32 %v661, %v663
        %v665 = vrot.slane %v656, %v664
        %v667 = vunpack.c.l.s4 1966171168
        %v668 = vunpack.c.0.s8 %v667
        %v669 = vlaneseq
        %v670 = vshrl.u32 %v669, 7
        %v671 = vsub.s32 %v668, %v670
        %v672 = vrot.slane %v658, %v671
        %v673 = vcombine.high %v665, %v665
        %v674 = vcombine.high %v672, %v672
        %v676 = vunpack.c.l.s4 1966171168
        %v677 = vunpack.c.0.s8 %v676
        %v678 = vlaneseq
        %v679 = vshrl.u32 %v678, 7
        %v680 = vsub.s32 %v677, %v679
        %v681 = vrot.slane %v665, %v680
        %v683 = vunpack.c.l.s4 1966171168
        %v684 = vunpack.c.0.s8 %v683
        %v685 = vlaneseq
        %v686 = vshrl.u32 %v685, 7
        %v687 = vsub.s32 %v684, %v686
        %v688 = vrot.slane %v672, %v687
        %v690 = vunpack.c.l.s4 1966171168
        %v691 = vunpack.c.0.s8 %v690
        %v692 = vlaneseq
        %v693 = vshrl.u32 %v692, 7
        %v694 = vsub.s32 %v691, %v693
        %v695 = vrot.slane %v673, %v694
        %v697 = vunpack.c.l.s4 1966171168
        %v698 = vunpack.c.0.s8 %v697
        %v699 = vlaneseq
        %v700 = vshrl.u32 %v699, 7
        %v701 = vsub.s32 %v698, %v700
        %v702 = vrot.slane %v674, %v701
        %v703 = vcombine.high %v681, %v681
        %v704 = vcombine.high %v688, %v688
        %v705 = vcombine.high %v695, %v695
        %v706 = vcombine.high %v702, %v702
        %v707 = vld [vmem:[%s299] sm:$0xff]
        %v709 = vcombine.high %v707, %v707
        %v711 = vunpack.c.l.s4 1966171168
        %v712 = vunpack.c.0.s8 %v711
        %v713 = vlaneseq
        %v714 = vshrl.u32 %v713, 7
        %v715 = vsub.s32 %v712, %v714
        %v716 = vrot.slane %v707, %v715
        %v718 = vunpack.c.l.s4 1966171168
        %v719 = vunpack.c.0.s8 %v718
        %v720 = vlaneseq
        %v721 = vshrl.u32 %v720, 7
        %v722 = vsub.s32 %v719, %v721
        %v723 = vrot.slane %v709, %v722
        %v724 = vcombine.high %v716, %v716
        %v725 = vcombine.high %v723, %v723
        %v727 = vunpack.c.l.s4 1966171168
        %v728 = vunpack.c.0.s8 %v727
        %v729 = vlaneseq
        %v730 = vshrl.u32 %v729, 7
        %v731 = vsub.s32 %v728, %v730
        %v732 = vrot.slane %v716, %v731
        %v734 = vunpack.c.l.s4 1966171168
        %v735 = vunpack.c.0.s8 %v734
        %v736 = vlaneseq
        %v737 = vshrl.u32 %v736, 7
        %v738 = vsub.s32 %v735, %v737
        %v739 = vrot.slane %v723, %v738
        %v741 = vunpack.c.l.s4 1966171168
        %v742 = vunpack.c.0.s8 %v741
        %v743 = vlaneseq
        %v744 = vshrl.u32 %v743, 7
        %v745 = vsub.s32 %v742, %v744
        %v746 = vrot.slane %v724, %v745
        %v748 = vunpack.c.l.s4 1966171168
        %v749 = vunpack.c.0.s8 %v748
        %v750 = vlaneseq
        %v751 = vshrl.u32 %v750, 7
        %v752 = vsub.s32 %v749, %v751
        %v753 = vrot.slane %v725, %v752
        %v754 = vcombine.high %v732, %v732
        %v755 = vcombine.high %v739, %v739
        %v756 = vcombine.high %v746, %v746
        %v757 = vcombine.high %v753, %v753
        %766 = vrot.lane.b32.xlu0 %v580, 124
        %v767 = vpop.permute.xlu0 %766
        %768 = vrot.lane.b32.xlu0 %v581, 124
        %v769 = vpop.permute.xlu0 %768
        %770 = vrot.lane.b32.xlu0 %v582, 124
        %v771 = vpop.permute.xlu0 %770
        %772 = vrot.lane.b32.xlu0 %v583, 124
        %v773 = vpop.permute.xlu0 %772
        %774 = vrot.lane.b32.xlu0 %v584, 124
        %v775 = vpop.permute.xlu0 %774
        %776 = vrot.lane.b32.xlu0 %v585, 124
        %v777 = vpop.permute.xlu0 %776
        %778 = vrot.lane.b32.xlu0 %v586, 124
        %v779 = vpop.permute.xlu0 %778
        %780 = vrot.lane.b32.xlu0 %v587, 124
        %v781 = vpop.permute.xlu0 %780
        %790 = vrot.lane.b32.xlu0 %v580, 4
        %v791 = vpop.permute.xlu0 %790
        %792 = vrot.lane.b32.xlu0 %v581, 4
        %v793 = vpop.permute.xlu0 %792
        %794 = vrot.lane.b32.xlu0 %v582, 4
        %v795 = vpop.permute.xlu0 %794
        %796 = vrot.lane.b32.xlu0 %v583, 4
        %v797 = vpop.permute.xlu0 %796
        %798 = vrot.lane.b32.xlu0 %v584, 4
        %v799 = vpop.permute.xlu0 %798
        %800 = vrot.lane.b32.xlu0 %v585, 4
        %v801 = vpop.permute.xlu0 %800
        %802 = vrot.lane.b32.xlu0 %v586, 4
        %v803 = vpop.permute.xlu0 %802
        %804 = vrot.lane.b32.xlu0 %v587, 4
        %v805 = vpop.permute.xlu0 %804
        %vm814 = vcmask 31744
        %v815 = vsel %vm814, %v767, %v791
        %v816 = vsel %vm814, %v769, %v793
        %v817 = vsel %vm814, %v771, %v795
        %v818 = vsel %vm814, %v773, %v797
        %v819 = vsel %vm814, %v775, %v799
        %v820 = vsel %vm814, %v777, %v801
        %v821 = vsel %vm814, %v779, %v803
        %v822 = vsel %vm814, %v781, %v805
        %v823 = vlaneseq
        %v824 = vshrl.u32 %v823, 7
        %v825 = vsub.s32 0, %v824
        %v826 = vrot.slane %v681, %v825
        %v827 = vlaneseq
        %v828 = vshrl.u32 %v827, 7
        %v829 = vsub.s32 0, %v828
        %v830 = vrot.slane %v695, %v829
        %v831 = vlaneseq
        %v832 = vshrl.u32 %v831, 7
        %v833 = vsub.s32 0, %v832
        %v834 = vrot.slane %v703, %v833
        %v835 = vlaneseq
        %v836 = vshrl.u32 %v835, 7
        %v837 = vsub.s32 0, %v836
        %v838 = vrot.slane %v705, %v837
        %v839 = vlaneseq
        %v840 = vshrl.u32 %v839, 7
        %v841 = vsub.s32 0, %v840
        %v842 = vrot.slane %v688, %v841
        %v843 = vlaneseq
        %v844 = vshrl.u32 %v843, 7
        %v845 = vsub.s32 0, %v844
        %v846 = vrot.slane %v702, %v845
        %v847 = vlaneseq
        %v848 = vshrl.u32 %v847, 7
        %v849 = vsub.s32 0, %v848
        %v850 = vrot.slane %v704, %v849
        %v851 = vlaneseq
        %v852 = vshrl.u32 %v851, 7
        %v853 = vsub.s32 0, %v852
        %v854 = vrot.slane %v706, %v853
        %v863 = vmul.f32 %v580, %v826
        %v864 = vmul.f32 %v581, %v830
        %v865 = vmul.f32 %v582, %v834
        %v866 = vmul.f32 %v583, %v838
        %v867 = vmul.f32 %v584, %v842
        %v868 = vmul.f32 %v585, %v846
        %v869 = vmul.f32 %v586, %v850
        %v870 = vmul.f32 %v587, %v854
        %v871 = vlaneseq
        %v872 = vshrl.u32 %v871, 7
        %v873 = vsub.s32 0, %v872
        %v874 = vrot.slane %v732, %v873
        %v875 = vlaneseq
        %v876 = vshrl.u32 %v875, 7
        %v877 = vsub.s32 0, %v876
        %v878 = vrot.slane %v746, %v877
        %v879 = vlaneseq
        %v880 = vshrl.u32 %v879, 7
        %v881 = vsub.s32 0, %v880
        %v882 = vrot.slane %v754, %v881
        %v883 = vlaneseq
        %v884 = vshrl.u32 %v883, 7
        %v885 = vsub.s32 0, %v884
        %v886 = vrot.slane %v756, %v885
        %v887 = vlaneseq
        %v888 = vshrl.u32 %v887, 7
        %v889 = vsub.s32 0, %v888
        %v890 = vrot.slane %v739, %v889
        %v891 = vlaneseq
        %v892 = vshrl.u32 %v891, 7
        %v893 = vsub.s32 0, %v892
        %v894 = vrot.slane %v753, %v893
        %v895 = vlaneseq
        %v896 = vshrl.u32 %v895, 7
        %v897 = vsub.s32 0, %v896
        %v898 = vrot.slane %v755, %v897
        %v899 = vlaneseq
        %v900 = vshrl.u32 %v899, 7
        %v901 = vsub.s32 0, %v900
        %v902 = vrot.slane %v757, %v901
        %v911 = vmul.f32 %v815, %v874
        %v912 = vmul.f32 %v816, %v878
        %v913 = vmul.f32 %v817, %v882
        %v914 = vmul.f32 %v818, %v886
        %v915 = vmul.f32 %v819, %v890
        %v916 = vmul.f32 %v820, %v894
        %v917 = vmul.f32 %v821, %v898
        %v918 = vmul.f32 %v822, %v902
        %v919 = vadd.f32 %v863, %v911
        %v920 = vadd.f32 %v864, %v912
        %v921 = vadd.f32 %v865, %v913
        %v922 = vadd.f32 %v866, %v914
        %v923 = vadd.f32 %v867, %v915
        %v924 = vadd.f32 %v868, %v916
        %v925 = vadd.f32 %v869, %v917
        %v926 = vadd.f32 %v870, %v918
        %v927 = vcombine.low %v919, %v921
        %v928 = vcombine.high %v919, %v921
        %v930 = vunpack.c.l.s4 1983009808
        %v931 = vunpack.c.0.s8 %v930
        %v932 = vlaneseq
        %v933 = vshrl.u32 %v932, 7
        %v934 = vsub.s32 %v931, %v933
        %v935 = vrot.slane %v927, %v934
        %v937 = vunpack.c.l.s4 1983009808
        %v938 = vunpack.c.0.s8 %v937
        %v939 = vlaneseq
        %v940 = vshrl.u32 %v939, 7
        %v941 = vsub.s32 %v938, %v940
        %v942 = vrot.slane %v928, %v941
        %v943 = vcombine.low %v920, %v922
        %v944 = vcombine.high %v920, %v922
        %v946 = vunpack.c.l.s4 1983009808
        %v947 = vunpack.c.0.s8 %v946
        %v948 = vlaneseq
        %v949 = vshrl.u32 %v948, 7
        %v950 = vsub.s32 %v947, %v949
        %v951 = vrot.slane %v943, %v950
        %v953 = vunpack.c.l.s4 1983009808
        %v954 = vunpack.c.0.s8 %v953
        %v955 = vlaneseq
        %v956 = vshrl.u32 %v955, 7
        %v957 = vsub.s32 %v954, %v956
        %v958 = vrot.slane %v944, %v957
        %v959 = vcombine.low %v923, %v925
        %v960 = vcombine.high %v923, %v925
        %v962 = vunpack.c.l.s4 1983009808
        %v963 = vunpack.c.0.s8 %v962
        %v964 = vlaneseq
        %v965 = vshrl.u32 %v964, 7
        %v966 = vsub.s32 %v963, %v965
        %v967 = vrot.slane %v959, %v966
        %v969 = vunpack.c.l.s4 1983009808
        %v970 = vunpack.c.0.s8 %v969
        %v971 = vlaneseq
        %v972 = vshrl.u32 %v971, 7
        %v973 = vsub.s32 %v970, %v972
        %v974 = vrot.slane %v960, %v973
        %v975 = vcombine.low %v924, %v926
        %v976 = vcombine.high %v924, %v926
        %v978 = vunpack.c.l.s4 1983009808
        %v979 = vunpack.c.0.s8 %v978
        %v980 = vlaneseq
        %v981 = vshrl.u32 %v980, 7
        %v982 = vsub.s32 %v979, %v981
        %v983 = vrot.slane %v975, %v982
        %v985 = vunpack.c.l.s4 1983009808
        %v986 = vunpack.c.0.s8 %v985
        %v987 = vlaneseq
        %v988 = vshrl.u32 %v987, 7
        %v989 = vsub.s32 %v986, %v988
        %v990 = vrot.slane %v976, %v989
        %v991 = vcombine.low %v935, %v951
        %v992 = vcombine.high %v935, %v951
        %v994 = vunpack.c.l.s4 1934713408
        %v995 = vunpack.c.0.s8 %v994
        %v996 = vlaneseq
        %v997 = vshrl.u32 %v996, 7
        %v998 = vsub.s32 %v995, %v997
        %v999 = vrot.slane %v991, %v998
        %v1001 = vunpack.c.l.s4 1934713408
        %v1002 = vunpack.c.0.s8 %v1001
        %v1003 = vlaneseq
        %v1004 = vshrl.u32 %v1003, 7
        %v1005 = vsub.s32 %v1002, %v1004
        %v1006 = vrot.slane %v992, %v1005
        %v1007 = vcombine.low %v942, %v958
        %v1008 = vcombine.high %v942, %v958
        %v1010 = vunpack.c.l.s4 1934713408
        %v1011 = vunpack.c.0.s8 %v1010
        %v1012 = vlaneseq
        %v1013 = vshrl.u32 %v1012, 7
        %v1014 = vsub.s32 %v1011, %v1013
        %v1015 = vrot.slane %v1007, %v1014
        %v1017 = vunpack.c.l.s4 1934713408
        %v1018 = vunpack.c.0.s8 %v1017
        %v1019 = vlaneseq
        %v1020 = vshrl.u32 %v1019, 7
        %v1021 = vsub.s32 %v1018, %v1020
        %v1022 = vrot.slane %v1008, %v1021
        %v1023 = vcombine.low %v967, %v983
        %v1024 = vcombine.high %v967, %v983
        %v1026 = vunpack.c.l.s4 1934713408
        %v1027 = vunpack.c.0.s8 %v1026
        %v1028 = vlaneseq
        %v1029 = vshrl.u32 %v1028, 7
        %v1030 = vsub.s32 %v1027, %v1029
        %v1031 = vrot.slane %v1023, %v1030
        %v1033 = vunpack.c.l.s4 1934713408
        %v1034 = vunpack.c.0.s8 %v1033
        %v1035 = vlaneseq
        %v1036 = vshrl.u32 %v1035, 7
        %v1037 = vsub.s32 %v1034, %v1036
        %v1038 = vrot.slane %v1024, %v1037
        %v1039 = vcombine.low %v974, %v990
        %v1040 = vcombine.high %v974, %v990
        %v1042 = vunpack.c.l.s4 1934713408
        %v1043 = vunpack.c.0.s8 %v1042
        %v1044 = vlaneseq
        %v1045 = vshrl.u32 %v1044, 7
        %v1046 = vsub.s32 %v1043, %v1045
        %v1047 = vrot.slane %v1039, %v1046
        %v1049 = vunpack.c.l.s4 1934713408
        %v1050 = vunpack.c.0.s8 %v1049
        %v1051 = vlaneseq
        %v1052 = vshrl.u32 %v1051, 7
        %v1053 = vsub.s32 %v1050, %v1052
        %v1054 = vrot.slane %v1040, %v1053
        %v1055 = vcombine.low %v999, %v1031
        %v1056 = vcombine.high %v999, %v1031
        %v1057 = vcombine.low %v1006, %v1038
        %v1058 = vcombine.high %v1006, %v1038
        %v1059 = vcombine.low %v1015, %v1047
        %v1060 = vcombine.high %v1015, %v1047
        %v1061 = vcombine.low %v1022, %v1054
        %v1062 = vcombine.high %v1022, %v1054
        %v1063 = vcombine.low %v628, %v635
        %v1065 = vunpack.c.l.s4 1983009808
        %v1066 = vunpack.c.0.s8 %v1065
        %v1067 = vlaneseq
        %v1068 = vshrl.u32 %v1067, 7
        %v1069 = vsub.s32 %v1066, %v1068
        %v1070 = vrot.slane %v1063, %v1069
        %v1071 = vcombine.low %v652, %v653
        %v1073 = vunpack.c.l.s4 1983009808
        %v1074 = vunpack.c.0.s8 %v1073
        %v1075 = vlaneseq
        %v1076 = vshrl.u32 %v1075, 7
        %v1077 = vsub.s32 %v1074, %v1076
        %v1078 = vrot.slane %v1071, %v1077
        %v1079 = vcombine.low %v644, %v651
        %v1081 = vunpack.c.l.s4 1983009808
        %v1082 = vunpack.c.0.s8 %v1081
        %v1083 = vlaneseq
        %v1084 = vshrl.u32 %v1083, 7
        %v1085 = vsub.s32 %v1082, %v1084
        %v1086 = vrot.slane %v1079, %v1085
        %v1087 = vcombine.low %v654, %v655
        %v1089 = vunpack.c.l.s4 1983009808
        %v1090 = vunpack.c.0.s8 %v1089
        %v1091 = vlaneseq
        %v1092 = vshrl.u32 %v1091, 7
        %v1093 = vsub.s32 %v1090, %v1092
        %v1094 = vrot.slane %v1087, %v1093
        %v1095 = vcombine.low %v1070, %v1078
        %v1096 = vcombine.high %v1070, %v1078
        %v1098 = vunpack.c.l.s4 1934713408
        %v1099 = vunpack.c.0.s8 %v1098
        %v1100 = vlaneseq
        %v1101 = vshrl.u32 %v1100, 7
        %v1102 = vsub.s32 %v1099, %v1101
        %v1103 = vrot.slane %v1095, %v1102
        %v1105 = vunpack.c.l.s4 1934713408
        %v1106 = vunpack.c.0.s8 %v1105
        %v1107 = vlaneseq
        %v1108 = vshrl.u32 %v1107, 7
        %v1109 = vsub.s32 %v1106, %v1108
        %v1110 = vrot.slane %v1096, %v1109
        %v1111 = vcombine.low %v1086, %v1094
        %v1112 = vcombine.high %v1086, %v1094
        %v1114 = vunpack.c.l.s4 1934713408
        %v1115 = vunpack.c.0.s8 %v1114
        %v1116 = vlaneseq
        %v1117 = vshrl.u32 %v1116, 7
        %v1118 = vsub.s32 %v1115, %v1117
        %v1119 = vrot.slane %v1111, %v1118
        %v1121 = vunpack.c.l.s4 1934713408
        %v1122 = vunpack.c.0.s8 %v1121
        %v1123 = vlaneseq
        %v1124 = vshrl.u32 %v1123, 7
        %v1125 = vsub.s32 %v1122, %v1124
        %v1126 = vrot.slane %v1112, %v1125
        %v1127 = vcombine.low %v1103, %v1119
        %v1128 = vcombine.high %v1103, %v1119
        %v1129 = vcombine.low %v1110, %v1126
        %v1130 = vcombine.high %v1110, %v1126
        %vm1131 = vcmask 64512
        %1132 = vst.msk [vmem:[%s337] sm:$0xff] %vm1131, %v1055
        %1133 = vst.msk [vmem:[%s337 + $0x8] sm:$0xff] %vm1131, %v1056
        %1134 = vst.msk [vmem:[%s337 + $0x10] sm:$0xff] %vm1131, %v1057
        %1135 = vst.msk [vmem:[%s337 + $0x18] sm:$0xff] %vm1131, %v1058
        %1136 = vst.msk [vmem:[%s337 + $0x20] sm:$0xff] %vm1131, %v1059
        %1137 = vst.msk [vmem:[%s337 + $0x28] sm:$0xff] %vm1131, %v1060
        %1138 = vst.msk [vmem:[%s337 + $0x30] sm:$0xff] %vm1131, %v1061
        %1139 = vst.msk [vmem:[%s337 + $0x38] sm:$0xff] %vm1131, %v1062
        %1140 = vst.msk [vmem:[%s337 + $0x40] sm:$0xff] %vm1131, %v1127
        %1141 = vst.msk [vmem:[%s337 + $0x48] sm:$0xff] %vm1131, %v1128
        %1142 = vst.msk [vmem:[%s337 + $0x50] sm:$0xff] %vm1131, %v1129
        %1143 = vst.msk [vmem:[%s337 + $0x58] sm:$0xff] %vm1131, %v1130
        %s1144 = sand.u32 %s166, 1
        %s1145 = scalar_lea.sflag [#allocation4], %s1144
        %s1146 = sand.u32 %s166, 1
        %s1147 = smul.addr %s1146, 96
        %s1148 = scalar_lea.vmem [#allocation10], %s1147
        // Predicated region
        $region53: #{tpu_custom_call.1} parent=35 // pred_check
          %p1149 = pneg %p176
        $region54: #{tpu_custom_call.1} parent=35 // pred_check_branch
          %1151 = sbr.rel (%p1149) target = $region56
        $region55: #{tpu_custom_call.1} parent=35 // pred_region
          %s1152 = smul.u32 12, %s32
          %s1154 = ssub.s32 1536, 1536
          %1155 = vsyncadd %s1145, %s1154
          %s1156 = sadd.s32 %s31, %s1152
          %s1157 = smul.addr %s30, 12
          %s1158 = sadd.s32 %s1156, %s1157
          %s1159 = smul.addr %s1158, 128
          %s1160 = scalar_lea.hbm %s4, %s1159
          %s1161 = sshll.u32 %s1148, 4
          %s1162 = int_to_ptr.vmem [resolvable:$true] %s1161
          %1167 = dma.vmem_to_hbm [thread:$0]  %s1162, 1536, %s1160, %s1145, 128, 128, 8
        $region56: #{tpu_custom_call.1} parent=35 // pred_fallthru
          _
      $region36: #{tpu_custom_call.1} parent=5 // pred_fallthru
        _
      %p1168 = scmp.le.s32.totalorder 2, %s20
      // Predicated region
      $region57: #{tpu_custom_call.1} parent=5 // pred_check
        %p1169 = pneg %p1168
      $region58: #{tpu_custom_call.1} parent=5 // pred_check_branch
        %1171 = sbr.rel (%p1169) target = $region60
      $region59: #{tpu_custom_call.1} parent=5 // pred_region
        %s1172 = ssub.s32 %s20, 2
        // Predicated region
        $region61: #{tpu_custom_call.1} parent=59 // pred_check
          %p1173 = pneg %p182
        $region62: #{tpu_custom_call.1} parent=59 // pred_check_branch
          %1175 = sbr.rel (%p1173) target = $region64
        $region63: #{tpu_custom_call.1} parent=59 // pred_region
          %s1176 = sand.u32 %s167, 1
          %s1177 = scalar_lea.sflag [#allocation4], %s1176
          %s1178 = sand.u32 %s167, 1
          %s1179 = smul.addr %s1178, 96
          %s1180 = scalar_lea.vmem [#allocation10], %s1179
          %1181 = dma.done %s1177, 1536
        $region64: #{tpu_custom_call.1} parent=59 // pred_fallthru
          _
      $region60: #{tpu_custom_call.1} parent=5 // pred_fallthru
        _
    $region6: #{tpu_custom_call.1} parent=1 // loop_footer
      %s24 = sadd.s32 1, %s20
    $region7: #{tpu_custom_call.1} parent=1 // loop_footer_branch
      %19 = sbr.rel target = $region3
    $region8: #{tpu_custom_call.1} parent=1 // loop_exit
      _
    %1182 = vsyncpa [#allocation3], 1
    %s1183 = scalar_lea.sflag [#allocation3], 1
    %1184 = vsyncpa %s1183, 1
    %1185 = vsyncpa [#allocation6], 1
    %s1186 = scalar_lea.sflag [#allocation6], 1
    %1187 = vsyncpa %s1186, 1
    %1188 = vsyncpa [#allocation9], 1
    %1189 = vsyncpa [#allocation4], 1
    %s1190 = scalar_lea.sflag [#allocation4], 1
    %1191 = vsyncpa %s1190, 1

</llo_original>
